<compile_context>
chip_gen: v6e
topology: v6e:2x2x1
jax: 0.10.0
libtpu: 0.0.40
codegen_flags: <defaults>
</compile_context>

<pallas_src>
import jax
import jax.numpy as jnp
from jax.experimental import pallas as pl
from jax.experimental.pallas import tpu as pltpu


def decoder_kernel(x_ref, w_ref, b_ref, o_ref):
    x = x_ref[...]
    w = w_ref[...]
    if x.dtype != w.dtype:
        # Mixed precision (e.g. f32 activations with pre-cast bf16 weights).
        ct = jnp.promote_types(x.dtype, w.dtype)
        x = x.astype(ct)
        w = w.astype(ct)
    y = jnp.dot(x, w, preferred_element_type=jnp.float32)
    y = y + b_ref[...].astype(jnp.float32)           # (1, tn) broadcast over (tm, tn)
    # LeakyReLU(0.2): max(y, 0.2*y) == where(y > 0, y, 0.2*y) for slope in (0, 1).
    o_ref[...] = jnp.maximum(y, 0.2 * y).astype(o_ref.dtype)


def _round_up(x, m):
    return ((x + m - 1) // m) * m


def prepare_decoder_params(weight, bias, *, param_dtype=None):
    """ONE-TIME parameter prep (call at model init, NOT per forward pass).

    weight: (poi_embed_dim, user_embed_dim)  -- PyTorch nn.Linear layout.
    bias:   (poi_embed_dim,)

    Returns (w_t, bias_2d): w_t is (user_embed_dim, poi_embed_dim) so the
    kernel computes y = x @ w_t + b with a lane-dense output.  Pass
    param_dtype=jnp.bfloat16 to halve W's HBM traffic on all TPU generations
    (including v5e: the MXU accepts bf16 operands with f32 accumulation; the
    epilogue stays f32).  Bias is kept in f32.  Precision tradeoff: bf16
    weights lose ~3 decimal digits.
    """
    Dp, Du = weight.shape
    assert bias.shape == (Dp,)
    w_t = jnp.asarray(weight).T
    if param_dtype is not None:
        w_t = w_t.astype(param_dtype)
    b2 = jnp.asarray(bias, jnp.float32).reshape(1, Dp)
    return w_t, b2


def _single_block_forward(x, w, b2, out_dtype):
    B, Du = x.shape
    _, Dp = w.shape
    # Whole problem in one VMEM-resident block: no padding, no grid-step
    # overhead, Mosaic masks the sub-(8,128) edges internally.
    return pl.pallas_call(
        decoder_kernel,
        out_shape=jax.ShapeDtypeStruct((B, Dp), out_dtype),
    )(x, w, b2)


def _tiled_forward(x, w, b2, out_dtype, tm, tn, vmem_budget):
    B, Du = x.shape
    _, Dp = w.shape
    x_isz = x.dtype.itemsize
    w_isz = w.dtype.itemsize
    b_isz = b2.dtype.itemsize
    o_isz = jnp.dtype(out_dtype).itemsize

    # Sublane granularity: 16 for 2-byte activations (native bf16 packing), else 8.
    sub = 16 if x_isz == 2 else 8
    if tm is None:
        tm = 256
    tm = max(sub, _round_up(tm, sub))
    tm = min(tm, _round_up(B, sub))        # never blow the batch up past one tile

    if tn is None:
        tn = 1024                          # big lane-dense tiles: fewer grid steps
    tn = max(128, (tn // 128) * 128)

    def footprint(tn_):
        # Double-buffered x / W / bias tiles + double-buffered output tile.
        return 2 * (tm * Du * x_isz + Du * tn_ * w_isz + tn_ * b_isz
                    + tm * tn_ * o_isz)

    # Shrink tn (not the VMEM limit) until the pipelined footprint fits.
    while tn > 128 and footprint(tn) > vmem_budget:
        tn //= 2
    tn = max(128, (tn // 128) * 128)

    gi = pl.cdiv(B, tm)    # row tiles   (inner / fast axis)
    gj = pl.cdiv(Dp, tn)   # column tiles (outer) -> each W tile DMA'd exactly once

    vmem_limit = int(min(max(2 * footprint(tn), 8 << 20), vmem_budget))

    return pl.pallas_call(
        decoder_kernel,
        out_shape=jax.ShapeDtypeStruct((B, Dp), out_dtype),
        grid=(gj, gi),
        in_specs=[
            pl.BlockSpec((tm, Du), lambda j, i: (i, 0)),   # x row tile (small, re-read gj times)
            pl.BlockSpec((Du, tn), lambda j, i: (0, j)),   # W col tile (big, read once total)
            pl.BlockSpec((1, tn), lambda j, i: (0, j)),    # bias tile  (read once per j)
        ],
        out_specs=pl.BlockSpec((tm, tn), lambda j, i: (i, j)),
        compiler_params=pltpu.CompilerParams(
            dimension_semantics=("parallel", "parallel"),
            vmem_limit_bytes=vmem_limit),
    )(x, w, b2)


def decoder_forward(user_embed, w_t, bias2d, *, tm=None, tn=None,
                    force_tiled=False,
                    vmem_budget_bytes=48 << 20,         # safe on v7x (64 MiB/TC)
                    single_block_max_bytes=6 << 20):
    """user_embed: (B, Du); w_t/bias2d from prepare_decoder_params -> (B, Dp)."""
    B, Du = user_embed.shape
    Du_w, Dp = w_t.shape
    assert Du == Du_w and bias2d.shape == (1, Dp)
    out_dtype = user_embed.dtype

    total_bytes = (user_embed.size * user_embed.dtype.itemsize
                   + w_t.size * w_t.dtype.itemsize
                   + bias2d.size * bias2d.dtype.itemsize
                   + B * Dp * jnp.dtype(out_dtype).itemsize
                   + B * Dp * 4)           # f32 intermediate
    if not force_tiled and total_bytes <= single_block_max_bytes:
        return _single_block_forward(user_embed, w_t, bias2d, out_dtype)
    return _tiled_forward(user_embed, w_t, bias2d, out_dtype, tm, tn,
                          vmem_budget_bytes)


def reference_forward(user_embed, weight, bias):
    """Pure-JAX reference with PyTorch-layout weight (Dp, Du)."""
    y = user_embed.astype(jnp.float32) @ weight.astype(jnp.float32).T + bias
    return jnp.where(y > 0, y, 0.2 * y)


if __name__ == "__main__":
    # Small shapes consistent with Decoder(user_embed_dim, poi_embed_dim).
    batch = 8
    user_embed_dim = 32
    poi_embed_dim = 64

    key = jax.random.PRNGKey(0)
    kx, kw, kb = jax.random.split(key, 3)
    user_embed = jax.random.normal(kx, (batch, user_embed_dim), dtype=jnp.float32)
    # PyTorch nn.Linear layout: (out_features, in_features).
    weight = (jax.random.normal(kw, (poi_embed_dim, user_embed_dim), dtype=jnp.float32)
              * (user_embed_dim ** -0.5))
    bias = jax.random.normal(kb, (poi_embed_dim,), dtype=jnp.float32) * 0.01

    ref = reference_forward(user_embed, weight, bias)

    # --- f32 weights, single-block fast path (matches PyTorch f32 semantics) ---
    w32, b32 = prepare_decoder_params(weight, bias)          # one-time, at "init"
    out = decoder_forward(user_embed, w32, b32)
    jax.block_until_ready(out)
    assert out.shape == (batch, poi_embed_dim)
    assert jnp.allclose(out, ref, atol=1e-5, rtol=1e-5)

    # --- pre-cast bf16 weights (halves W HBM traffic on v5e/v6e/v7x), f32 x & epilogue ---
    wbf, bbf = prepare_decoder_params(weight, bias, param_dtype=jnp.bfloat16)
    out_bf = decoder_forward(user_embed, wbf, bbf)
    jax.block_until_ready(out_bf)
    assert out_bf.shape == (batch, poi_embed_dim)
    assert jnp.allclose(out_bf, ref, atol=5e-2, rtol=5e-2)

    # --- exercise the tiled streaming-W path on a small ragged problem ---
    B2, Du2, Dp2 = 12, 32, 200
    k2x, k2w, k2b = jax.random.split(jax.random.PRNGKey(1), 3)
    x2 = jax.random.normal(k2x, (B2, Du2), dtype=jnp.float32)
    w2 = jax.random.normal(k2w, (Dp2, Du2), dtype=jnp.float32) * (Du2 ** -0.5)
    b2v = jax.random.normal(k2b, (Dp2,), dtype=jnp.float32) * 0.01
    ref2 = reference_forward(x2, w2, b2v)
    pw2, pb2 = prepare_decoder_params(w2, b2v)
    out2 = decoder_forward(x2, pw2, pb2, tm=8, tn=128, force_tiled=True)
    jax.block_until_ready(out2)
    assert out2.shape == (B2, Dp2)
    assert jnp.allclose(out2, ref2, atol=1e-5, rtol=1e-5)

    print("KERNEL_OK")
</pallas_src>

<mosaic_0001>
module attributes {stable_mosaic.version = 11 : i64} {
  func.func @decoder_kernel(%arg0: memref<8x32xf32, #tpu.memory_space<vmem>>, %arg1: memref<32x64xf32, #tpu.memory_space<vmem>>, %arg2: memref<1x64xf32, #tpu.memory_space<vmem>>, %arg3: memref<8x64xf32, #tpu.memory_space<vmem>>) attributes {dimension_semantics = [], scalar_prefetch = 0 : i64, scratch_operands = 0 : i64, tpu.core_type = #tpu.core_type<tc>} {
    %c0 = arith.constant 0 : index
    %c0_0 = arith.constant 0 : index
    %0 = vector.load %arg0[%c0, %c0_0] : memref<8x32xf32, #tpu.memory_space<vmem>>, vector<8x32xf32>
    %c0_1 = arith.constant 0 : index
    %c0_2 = arith.constant 0 : index
    %1 = vector.load %arg1[%c0_1, %c0_2] : memref<32x64xf32, #tpu.memory_space<vmem>>, vector<32x64xf32>
    %cst = arith.constant dense<0.000000e+00> : vector<8x64xf32>
    %2 = tpu.matmul %0, %1, %cst {dimension_numbers = #tpu.dot_dimension_numbers<[1], [0], [0], [1], [0, 0, 1, 1], [], []>} : vector<8x32xf32>, vector<32x64xf32>, vector<8x64xf32> -> vector<8x64xf32>
    %c0_3 = arith.constant 0 : index
    %c0_4 = arith.constant 0 : index
    %3 = vector.load %arg2[%c0_3, %c0_4] : memref<1x64xf32, #tpu.memory_space<vmem>>, vector<1x64xf32>
    %4 = vector.broadcast %3 : vector<1x64xf32> to vector<8x64xf32>
    %5 = arith.addf %2, %4 : vector<8x64xf32>
    %cst_5 = arith.constant 2.000000e-01 : f32
    %6 = vector.broadcast %cst_5 : f32 to vector<8x64xf32>
    %7 = arith.mulf %6, %5 : vector<8x64xf32>
    %8 = arith.maximumf %5, %7 : vector<8x64xf32>
    %c0_6 = arith.constant 0 : index
    %c0_7 = arith.constant 0 : index
    %9 = vector.load %arg3[%c0_6, %c0_7] : memref<8x64xf32, #tpu.memory_space<vmem>>, vector<8x64xf32>
    tpu.vector_store %arg3[%c0_6, %c0_7], %8 {strides = array<i32>} : memref<8x64xf32, #tpu.memory_space<vmem>>, vector<8x64xf32>,
    return
  }
}

</mosaic_0001>

<llo_original>
// kernel: tpu_custom_call.1
$region0: #{tpu_custom_call.1}
  #allocation0 [shape = 'u32[]', space=smem, size = 0x4, offset = 0x4, fixed_abs, tag = 'smem constant byte address 0x4 - core index']
  #allocation1 [shape = 'u32[144,128]{1,0:T(1,128)}', space=vmem, size = 0x12000, scoped, tag = 'internal scratch']
  %s0 = inlined_call_operand.hbm [shape: f32[8,32], index: 0, kind: input, shape index: {}]
  %s1 = inlined_call_operand.hbm [shape: f32[32,64], index: 1, kind: input, shape index: {}]
  %s2 = inlined_call_operand.vmem [shape: f32[1,64], index: 2, kind: input, shape index: {}]
  %s3 = inlined_call_operand.hbm [shape: f32[8,64], index: 3, kind: output, shape index: {}]
  %s4 = sld [smem:[#allocation0]]
  $region30: #{tpu_custom_call.1} parent=0
    _
  %s6 = ssub.s32 1, %s4
  %s7 = scalar_select 0, %s6, %s4
  $region1: #{tpu_custom_call.1} parent=0
    #allocation2 [shape = 'u8[4096]{0}', space=vmem, size = 0x1000, scoped, tag = 'input window, operand 0, single buffered']
    #allocation3 [shape = 's32[1]{0}', space=sflag, size = 0x4, scoped, tag = 'scoped memory for tpu_custom_call.1']
    #allocation4 [shape = 's32[1]{0}', space=sflag, size = 0x4, scoped, tag = 'scoped memory for tpu_custom_call.1']
    #allocation5 [shape = 'u8[16384]{0}', space=vmem, size = 0x4000, scoped, tag = 'input window, operand 1, single buffered']
    #allocation6 [shape = 's32[1]{0}', space=sflag, size = 0x4, scoped, tag = 'scoped memory for tpu_custom_call.1']
    #allocation7 [shape = 'u8[4096]{0}', space=vmem, size = 0x1000, scoped, tag = 'output window, operand 0, single buffered']
    %8 = vsyncpa [#allocation3], 0
    %9 = vsyncpa [#allocation6], 0
    %10 = vsyncpa [#allocation4], 0
    // Predicated region
    $region2: #{tpu_custom_call.1} parent=1 // pred_check
      _
    $region3: #{tpu_custom_call.1} parent=1 // pred_check_branch
      %12 = sbr.rel (0) target = $region5
    $region4: #{tpu_custom_call.1} parent=1 // pred_region
      %s14 = ssub.s32 128, 128
      %15 = vsyncadd [#allocation3], %s14
      %s17 = sshll.u32 [#allocation2], 4
      %s18 = int_to_ptr.vmem [resolvable:$true] %s17
      %20 = dma.hbm_to_vmem [thread:$0]  %s0, 128, %s18, [#allocation3]
    $region5: #{tpu_custom_call.1} parent=1 // pred_fallthru
      _
    // Predicated region
    $region6: #{tpu_custom_call.1} parent=1 // pred_check
      _
    $region7: #{tpu_custom_call.1} parent=1 // pred_check_branch
      %22 = sbr.rel (0) target = $region9
    $region8: #{tpu_custom_call.1} parent=1 // pred_region
      %s24 = ssub.s32 512, 512
      %25 = vsyncadd [#allocation6], %s24
      %s26 = sshll.u32 [#allocation5], 4
      %s27 = int_to_ptr.vmem [resolvable:$true] %s26
      %32 = dma.hbm_to_vmem [thread:$0]  %s1, 512, %s27, [#allocation6], 128, 128, 8
    $region9: #{tpu_custom_call.1} parent=1 // pred_fallthru
      _
    // Predicated region
    $region10: #{tpu_custom_call.1} parent=1 // pred_check
      _
    $region11: #{tpu_custom_call.1} parent=1 // pred_check_branch
      %34 = sbr.rel (0) target = $region13
    $region12: #{tpu_custom_call.1} parent=1 // pred_region
      _
    $region13: #{tpu_custom_call.1} parent=1 // pred_fallthru
      _
    // Predicated region
    $region14: #{tpu_custom_call.1} parent=1 // pred_check
      _
    $region15: #{tpu_custom_call.1} parent=1 // pred_check_branch
      %36 = sbr.rel (0) target = $region17
    $region16: #{tpu_custom_call.1} parent=1 // pred_region
      %37 = dma.done [#allocation3], 128
    $region17: #{tpu_custom_call.1} parent=1 // pred_fallthru
      _
    // Predicated region
    $region18: #{tpu_custom_call.1} parent=1 // pred_check
      _
    $region19: #{tpu_custom_call.1} parent=1 // pred_check_branch
      %39 = sbr.rel (0) target = $region21
    $region20: #{tpu_custom_call.1} parent=1 // pred_region
      %40 = dma.done [#allocation6], 512
    $region21: #{tpu_custom_call.1} parent=1 // pred_fallthru
      _
    %v41 = vld [vmem:[#allocation2] sm:$0xff]
    %v42 = vld [vmem:[#allocation5] sm:$0xff]
    %v43 = vld [vmem:[#allocation5 + $0x8] sm:$0xff]
    %v44 = vld [vmem:[#allocation5 + $0x10] sm:$0xff]
    %v45 = vld [vmem:[#allocation5 + $0x18] sm:$0xff]
    %v46 = vld [vmem:[%s2] sm:$0x1]
    %v48 = vlaneseq
    %v49 = vshrl.u32 %v48, 7
    %v50 = vsub.s32 0, %v49
    %v51 = vrot.slane %v46, %v50
    %vm53 = vcmask 261120
    %v55 = vsel %vm53, %v41, 0
    %57 = vmatprep.subr.mxu0 0.0
    %58 = vmatpush1.msra.mxu0 0.0
    %59 = vmatprep.subr.mxu0 0.0
    %60 = vmatpush1.msra.mxu0 0.0
    %61 = vmatprep.subr.mxu0 0.0
    %62 = vmatpush1.msra.mxu0 0.0
    %63 = vmatprep.subr.mxu0 0.0
    %64 = vmatpush1.msra.mxu0 0.0
    %65 = vmatprep.subr.mxu0 0.0
    %66 = vmatpush1.msra.mxu0 0.0
    %67 = vmatprep.subr.mxu0 0.0
    %68 = vmatpush1.msra.mxu0 0.0
    %69 = vmatprep.subr.mxu0 0.0
    %70 = vmatpush1.msra.mxu0 0.0
    %71 = vmatprep.subr.mxu0 0.0
    %72 = vmatpush1.msra.mxu0 0.0
    %73 = vmatprep.subr.mxu0 0.0
    %74 = vmatpush1.msra.mxu0 0.0
    %75 = vmatprep.subr.mxu0 0.0
    %76 = vmatpush1.msra.mxu0 0.0
    %77 = vmatprep.subr.mxu0 0.0
    %78 = vmatpush1.msra.mxu0 0.0
    %79 = vmatprep.subr.mxu0 0.0
    %80 = vmatpush1.msra.mxu0 0.0
    %81 = vmatprep.subr.mxu0 0.0
    %82 = vmatpush1.msra.mxu0 %v45
    %83 = vmatprep.subr.mxu0 0.0
    %84 = vmatpush1.msra.mxu0 %v44
    %85 = vmatprep.subr.mxu0 0.0
    %86 = vmatpush1.msra.mxu0 %v43
    %87 = vmatprep.subr.mxu0 0.0
    %88 = vmatpush1.msra.mxu0 %v42
    %89 = vmatprep.subr.mxu0 0.0
    %90 = vmatpush2.msra.mxu0 0.0
    %91 = vmatprep.subr.mxu0 0.0
    %92 = vmatpush2.msra.mxu0 0.0
    %93 = vmatprep.subr.mxu0 0.0
    %94 = vmatpush2.msra.mxu0 0.0
    %95 = vmatprep.subr.mxu0 0.0
    %96 = vmatpush2.msra.mxu0 0.0
    %97 = vmatprep.subr.mxu0 0.0
    %98 = vmatpush2.msra.mxu0 0.0
    %99 = vmatprep.subr.mxu0 0.0
    %100 = vmatpush2.msra.mxu0 0.0
    %101 = vmatprep.subr.mxu0 0.0
    %102 = vmatpush2.msra.mxu0 0.0
    %103 = vmatprep.subr.mxu0 0.0
    %104 = vmatpush2.msra.mxu0 0.0
    %105 = vmatprep.subr.mxu0 0.0
    %106 = vmatpush2.msra.mxu0 0.0
    %107 = vmatprep.subr.mxu0 0.0
    %108 = vmatpush2.msra.mxu0 0.0
    %109 = vmatprep.subr.mxu0 0.0
    %110 = vmatpush2.msra.mxu0 0.0
    %111 = vmatprep.subr.mxu0 0.0
    %112 = vmatpush2.msra.mxu0 0.0
    %113 = vmatprep.subr.mxu0 0.0
    %114 = vmatpush2.msra.mxu0 0.0
    %115 = vmatprep.subr.mxu0 0.0
    %116 = vmatpush2.msra.mxu0 0.0
    %117 = vmatprep.subr.mxu0 0.0
    %118 = vmatpush2.msra.mxu0 0.0
    %119 = vmatprep.subr.mxu0 0.0
    %120 = vmatpush2.msra.mxu0 0.0
    %121 = vmatprep.mubr.f32.mxu0 0.0
    %122 = vmatmul.mubr.f32.gmra.mxu0 %v55
    %v123 = vpop.f32.mrf.mxu0
    %v124 = vadd.f32 %v51, %v123
    %v125 = vpop.f32.mrf.mxu0
    %126 = vdwg.mxu0
    %v127 = vmul.f32 %v124, 0.2
    %v128 = vmax.f32 %v124, %v127
    %vm129 = vcmask 523264
    %130 = vst.msk [vmem:[#allocation7] sm:$0xff] %vm129, %v128
    // Predicated region
    $region22: #{tpu_custom_call.1} parent=1 // pred_check
      _
    $region23: #{tpu_custom_call.1} parent=1 // pred_check_branch
      %132 = sbr.rel (0) target = $region25
    $region24: #{tpu_custom_call.1} parent=1 // pred_region
      %s134 = ssub.s32 128, 128
      %135 = vsyncadd [#allocation4], %s134
      %s137 = sshll.u32 [#allocation7], 4
      %s138 = int_to_ptr.vmem [resolvable:$true] %s137
      %140 = dma.vmem_to_hbm [thread:$0]  %s138, 128, %s3, [#allocation4]
    $region25: #{tpu_custom_call.1} parent=1 // pred_fallthru
      _
    // Predicated region
    $region26: #{tpu_custom_call.1} parent=1 // pred_check
      _
    $region27: #{tpu_custom_call.1} parent=1 // pred_check_branch
      %142 = sbr.rel (0) target = $region29
    $region28: #{tpu_custom_call.1} parent=1 // pred_region
      %143 = dma.done [#allocation4], 128
    $region29: #{tpu_custom_call.1} parent=1 // pred_fallthru
      _
    %144 = vsyncpa [#allocation3], 1
    %145 = vsyncpa [#allocation6], 1
    %146 = vsyncpa [#allocation4], 1

</llo_original>
